<compile_context>
chip_gen: v7x
topology: tpu7x:2x2x1
jax: 0.10.0
libtpu: 0.0.40
codegen_flags: <defaults>
</compile_context>

<pallas_src>
import functools
import math

import jax
import jax.numpy as jnp
from jax.experimental import pallas as pl
from jax.experimental.pallas import tpu as pltpu

_EPS = 1e-5  # torch default for BatchNorm2d / InstanceNorm2d / GroupNorm / LayerNorm

# ----------------------------------------------------------------------------
# Generation-aware VMEM budgeting
# ----------------------------------------------------------------------------
try:
    _VMEM_BYTES = int(pltpu.get_tpu_info().vmem_capacity_bytes)
except Exception:  # conservative fallback (v7x-sized)
    _VMEM_BYTES = 64 * 1024 * 1024

# Per-block f32 footprint budget: 2 (double-buffer) x (in + out) blocks plus
# in-kernel f32 temporaries must stay well inside the scoped limit below.
_BLOCK_BUDGET_BYTES = max(_VMEM_BYTES // 24, 1 << 20)
_VMEM_LIMIT_BYTES = int(min(_VMEM_BYTES // 2, 64 * 1024 * 1024))


def _divisors(n):
    ds = set()
    i = 1
    while i * i <= n:
        if n % i == 0:
            ds.add(i)
            ds.add(n // i)
        i += 1
    return sorted(ds)


def _pick_row_tile(rows, row_bytes_f32, dtype):
    """Largest divisor of `rows` that is sublane-layout valid (multiple of the
    dtype's sublane packing, or equal to `rows`) and whose f32 block footprint
    fits the per-block VMEM budget."""
    mult = max(8, 32 // jnp.dtype(dtype).itemsize)  # 8 f32, 16 bf16, 32 int8
    valid = [d for d in _divisors(rows) if d == rows or d % mult == 0]
    fitting = [d for d in valid if d * row_bytes_f32 <= _BLOCK_BUDGET_BYTES]
    if fitting:
        return max(fitting)
    # TODO(synk): rows whose reduction extent exceeds VMEM need grid-accumulated
    # moments (sum / sum-of-squares scratch over an "arbitrary" axis).
    return min(valid)


def _cost_estimate(numel, rows, itemsize):
    return pl.CostEstimate(flops=8 * int(numel),
                           transcendentals=int(rows),
                           bytes_accessed=2 * int(numel) * int(itemsize))


def _compiler_params():
    return pltpu.CompilerParams(dimension_semantics=("parallel",),
                                vmem_limit_bytes=_VMEM_LIMIT_BYTES)


def _tiled_norm_call(kernel, grid, in_specs, out_spec, out_shape, cost, *args):
    return pl.pallas_call(
        kernel,
        out_shape=out_shape,
        grid_spec=pltpu.PrefetchScalarGridSpec(
            num_scalar_prefetch=0,
            grid=grid,
            in_specs=in_specs,
            out_specs=out_spec,
        ),
        compiler_params=_compiler_params(),
        cost_estimate=cost,
    )(*args)


# ----------------------------------------------------------------------------
# Pallas kernels (stats in f32; biased variance, like torch train-mode)
# ----------------------------------------------------------------------------
def _bn_kernel(x_ref, w_ref, b_ref, o_ref, *, inv_m, eps):
    # x_ref: (N, TC, HW); w_ref/b_ref: (TC, 1) per-channel affine.
    x = x_ref[...].astype(jnp.float32)
    s = jnp.sum(jnp.sum(x, axis=2, keepdims=True), axis=0, keepdims=True)
    mean = s * inv_m                                             # (1, TC, 1)
    xc = x - mean
    s2 = jnp.sum(jnp.sum(xc * xc, axis=2, keepdims=True), axis=0, keepdims=True)
    var = s2 * inv_m
    scale = jax.lax.rsqrt(var + eps) * w_ref[...][None]          # (1, TC, 1)
    o_ref[...] = (xc * scale + b_ref[...][None]).astype(o_ref.dtype)


def _in_kernel(x_ref, o_ref, *, inv_m, eps):
    # x_ref: (TR, HW); per-row normalization, no affine.
    x = x_ref[...].astype(jnp.float32)
    mean = jnp.sum(x, axis=1, keepdims=True) * inv_m
    xc = x - mean
    var = jnp.sum(xc * xc, axis=1, keepdims=True) * inv_m
    o_ref[...] = (xc * jax.lax.rsqrt(var + eps)).astype(o_ref.dtype)


def _gn_kernel(x_ref, w_ref, b_ref, o_ref, *, inv_m, eps):
    # x_ref: (TR, Cg, HW) with rows = (n, g); w_ref/b_ref: (TR, Cg, 1).
    # Per-group stats + per-channel affine fused in one pass.
    x = x_ref[...].astype(jnp.float32)
    s = jnp.sum(jnp.sum(x, axis=2, keepdims=True), axis=1, keepdims=True)
    mean = s * inv_m                                             # (TR, 1, 1)
    xc = x - mean
    s2 = jnp.sum(jnp.sum(xc * xc, axis=2, keepdims=True), axis=1, keepdims=True)
    var = s2 * inv_m
    scale = jax.lax.rsqrt(var + eps) * w_ref[...]                # (TR, Cg, 1)
    o_ref[...] = (xc * scale + b_ref[...]).astype(o_ref.dtype)


def _layer_kernel(x_ref, w_ref, b_ref, o_ref, *, inv_m, eps):
    # x_ref: (TR, M); w_ref/b_ref: (1, M) per-column affine.
    x = x_ref[...].astype(jnp.float32)
    mean = jnp.sum(x, axis=1, keepdims=True) * inv_m
    xc = x - mean
    var = jnp.sum(xc * xc, axis=1, keepdims=True) * inv_m
    xhat = xc * jax.lax.rsqrt(var + eps)
    o_ref[...] = (xhat * w_ref[...] + b_ref[...]).astype(o_ref.dtype)


# ----------------------------------------------------------------------------
# NormLayer wrapper
# ----------------------------------------------------------------------------
class NormLayer:
    """JAX/Pallas port of GPEN NormLayer.forward (training-mode statistics)."""

    def __init__(self, channels, normalize_shape=None, norm_type='bn',
                 ref_channels=None, key=None):
        norm_type = norm_type.lower()
        self.norm_type = norm_type
        self.channels = channels
        key = jax.random.PRNGKey(42) if key is None else key
        kw, kb = jax.random.split(key)

        if norm_type == 'bn':        # nn.BatchNorm2d(channels, affine=True)
            self.weight = 1.0 + 0.1 * jax.random.normal(kw, (channels,), jnp.float32)
            self.bias = 0.1 * jax.random.normal(kb, (channels,), jnp.float32)
        elif norm_type == 'in':      # nn.InstanceNorm2d(channels, affine=False)
            self.weight = None
            self.bias = None
        elif norm_type == 'gn':      # nn.GroupNorm(32, channels, affine=True)
            assert channels % 32 == 0, 'GroupNorm(32, C) needs C % 32 == 0'
            self.num_groups = 32
            self.weight = 1.0 + 0.1 * jax.random.normal(kw, (channels,), jnp.float32)
            self.bias = 0.1 * jax.random.normal(kb, (channels,), jnp.float32)
        elif norm_type == 'layer':   # nn.LayerNorm(normalize_shape)
            if isinstance(normalize_shape, int):
                normalize_shape = (normalize_shape,)
            self.normalize_shape = tuple(normalize_shape)
            self.weight = 1.0 + 0.1 * jax.random.normal(
                kw, self.normalize_shape, jnp.float32)
            self.bias = 0.1 * jax.random.normal(kb, self.normalize_shape, jnp.float32)
        elif norm_type == 'none':    # nn.Identity()
            self.weight = None
            self.bias = None
        else:
            raise AssertionError(f'Norm type {norm_type} not support.')

    def __call__(self, x, ref=None):
        if self.norm_type == 'bn':
            # TODO(synk): running_mean / running_var updates of train-mode
            # BatchNorm2d are a side effect only; they do not affect the output.
            N, C, H, W = x.shape
            HW = H * W
            m = N * HW
            TC = _pick_row_tile(C, m * 4, x.dtype)
            x3 = x.reshape(N, C, HW)                      # contiguous (free) view
            w2 = self.weight.reshape(C, 1)
            b2 = self.bias.reshape(C, 1)
            kern = functools.partial(_bn_kernel, inv_m=1.0 / m, eps=_EPS)
            y3 = _tiled_norm_call(
                kern, (C // TC,),
                [pl.BlockSpec((N, TC, HW), lambda c: (0, c, 0)),
                 pl.BlockSpec((TC, 1), lambda c: (c, 0)),
                 pl.BlockSpec((TC, 1), lambda c: (c, 0))],
                pl.BlockSpec((N, TC, HW), lambda c: (0, c, 0)),
                jax.ShapeDtypeStruct((N, C, HW), x.dtype),
                _cost_estimate(x.size, C, x.dtype.itemsize),
                x3, w2, b2)
            return y3.reshape(N, C, H, W)

        if self.norm_type == 'in':
            N, C, H, W = x.shape
            HW = H * W
            rows = N * C
            TR = _pick_row_tile(rows, HW * 4, x.dtype)
            x2 = x.reshape(rows, HW)                      # contiguous (free) view
            kern = functools.partial(_in_kernel, inv_m=1.0 / HW, eps=_EPS)
            y2 = _tiled_norm_call(
                kern, (rows // TR,),
                [pl.BlockSpec((TR, HW), lambda i: (i, 0))],
                pl.BlockSpec((TR, HW), lambda i: (i, 0)),
                jax.ShapeDtypeStruct((rows, HW), x.dtype),
                _cost_estimate(x.size, rows, x.dtype.itemsize),
                x2)
            return y2.reshape(N, C, H, W)

        if self.norm_type == 'gn':
            N, C, H, W = x.shape
            G = self.num_groups
            Cg = C // G
            HW = H * W
            rows = N * G
            m = Cg * HW
            TR = _pick_row_tile(rows, m * 4, x.dtype)
            x3 = x.reshape(rows, Cg, HW)                  # contiguous (free) view
            # Per-channel affine fused in-kernel; weight rows follow (n, g).
            w3 = jnp.tile(self.weight.reshape(G, Cg), (N, 1))[:, :, None]
            b3 = jnp.tile(self.bias.reshape(G, Cg), (N, 1))[:, :, None]
            kern = functools.partial(_gn_kernel, inv_m=1.0 / m, eps=_EPS)
            y3 = _tiled_norm_call(
                kern, (rows // TR,),
                [pl.BlockSpec((TR, Cg, HW), lambda i: (i, 0, 0)),
                 pl.BlockSpec((TR, Cg, 1), lambda i: (i, 0, 0)),
                 pl.BlockSpec((TR, Cg, 1), lambda i: (i, 0, 0))],
                pl.BlockSpec((TR, Cg, HW), lambda i: (i, 0, 0)),
                jax.ShapeDtypeStruct((rows, Cg, HW), x.dtype),
                _cost_estimate(x.size, rows, x.dtype.itemsize),
                x3, w3, b3)
            return y3.reshape(N, C, H, W)

        if self.norm_type == 'layer':
            shape = self.normalize_shape
            M = math.prod(shape)
            assert x.shape[-len(shape):] == shape
            rows = math.prod(x.shape[:-len(shape)])
            TR = _pick_row_tile(rows, M * 4, x.dtype)
            x2 = x.reshape(rows, M)                       # contiguous (free) view
            w2 = self.weight.reshape(1, M)
            b2 = self.bias.reshape(1, M)
            kern = functools.partial(_layer_kernel, inv_m=1.0 / M, eps=_EPS)
            y2 = _tiled_norm_call(
                kern, (rows // TR,),
                [pl.BlockSpec((TR, M), lambda i: (i, 0)),
                 pl.BlockSpec((1, M), lambda i: (0, 0)),
                 pl.BlockSpec((1, M), lambda i: (0, 0))],
                pl.BlockSpec((TR, M), lambda i: (i, 0)),
                jax.ShapeDtypeStruct((rows, M), x.dtype),
                _cost_estimate(x.size, rows, x.dtype.itemsize),
                x2, w2, b2)
            return y2.reshape(x.shape)

        # 'none' -> nn.Identity()
        return x


# ----------------------------------------------------------------------------
# Pure-JAX references (for correctness checks)
# ----------------------------------------------------------------------------
def _bn_ref(x, w, b):
    mean = jnp.mean(x, axis=(0, 2, 3), keepdims=True)
    var = jnp.var(x, axis=(0, 2, 3), keepdims=True)
    return (x - mean) / jnp.sqrt(var + _EPS) * w[None, :, None, None] + b[None, :, None, None]


def _in_ref(x):
    mean = jnp.mean(x, axis=(2, 3), keepdims=True)
    var = jnp.var(x, axis=(2, 3), keepdims=True)
    return (x - mean) / jnp.sqrt(var + _EPS)


def _gn_ref(x, w, b, G=32):
    N, C, H, W = x.shape
    xg = x.reshape(N, G, C // G, H, W)
    mean = jnp.mean(xg, axis=(2, 3, 4), keepdims=True)
    var = jnp.var(xg, axis=(2, 3, 4), keepdims=True)
    xn = ((xg - mean) / jnp.sqrt(var + _EPS)).reshape(N, C, H, W)
    return xn * w[None, :, None, None] + b[None, :, None, None]


def _layer_ref(x, w, b, shape):
    axes = tuple(range(x.ndim - len(shape), x.ndim))
    mean = jnp.mean(x, axis=axes, keepdims=True)
    var = jnp.var(x, axis=axes, keepdims=True)
    return (x - mean) / jnp.sqrt(var + _EPS) * w + b


def _check(a, b, name):
    assert jnp.allclose(a, b, atol=1e-4, rtol=1e-4), f'{name} mismatch'


# ----------------------------------------------------------------------------
if __name__ == "__main__":
    key = jax.random.PRNGKey(0)
    kx, kx32, kbn, kgn, kln = jax.random.split(key, 5)

    x = jax.random.normal(kx, (2, 4, 16, 16), jnp.float32)        # NCHW
    x32 = jax.random.normal(kx32, (2, 32, 8, 8), jnp.float32)     # for GroupNorm(32, C)

    # bn (default)
    bn = NormLayer(4, norm_type='bn', key=kbn)
    y_bn = jax.block_until_ready(bn(x))
    _check(y_bn, _bn_ref(x, bn.weight, bn.bias), 'bn')

    # in
    inorm = NormLayer(4, norm_type='in')
    y_in = jax.block_until_ready(inorm(x))
    _check(y_in, _in_ref(x), 'in')

    # gn
    gn = NormLayer(32, norm_type='gn', key=kgn)
    y_gn = jax.block_until_ready(gn(x32))
    _check(y_gn, _gn_ref(x32, gn.weight, gn.bias), 'gn')

    # layer
    ln = NormLayer(4, normalize_shape=(16, 16), norm_type='layer', key=kln)
    y_ln = jax.block_until_ready(ln(x))
    _check(y_ln, _layer_ref(x, ln.weight, ln.bias, (16, 16)), 'layer')

    # none
    idn = NormLayer(4, norm_type='none')
    y_id = jax.block_until_ready(idn(x))
    _check(y_id, x, 'none')

    print("KERNEL_OK")
</pallas_src>

<mosaic_0001>
module attributes {stable_mosaic.version = 11 : i64} {
  func.func @_bn_kernel(%arg0: i32, %arg1: memref<2x4x256xf32, #tpu.memory_space<vmem>>, %arg2: memref<4x1xf32, #tpu.memory_space<vmem>>, %arg3: memref<4x1xf32, #tpu.memory_space<vmem>>, %arg4: memref<2x4x256xf32, #tpu.memory_space<vmem>>) attributes {dimension_semantics = [#tpu.dimension_semantics<parallel>], iteration_bounds = array<i64: 1>, scalar_prefetch = 0 : i64, scratch_operands = 0 : i64, tpu.core_type = #tpu.core_type<tc>, window_params = [{transform_indices = @transform_0, window_bounds = array<i64: 2, 4, 256>}, {transform_indices = @transform_1, window_bounds = array<i64: 4, 1>}, {transform_indices = @transform_2, window_bounds = array<i64: 4, 1>}, {transform_indices = @transform_3, window_bounds = array<i64: 2, 4, 256>}]} {
    %c0 = arith.constant 0 : index
    %c0_0 = arith.constant 0 : index
    %c0_1 = arith.constant 0 : index
    %0 = vector.load %arg1[%c0, %c0_0, %c0_1] : memref<2x4x256xf32, #tpu.memory_space<vmem>>, vector<2x4x256xf32>
    %cst = arith.constant dense<0.000000e+00> : vector<2x4xf32>
    %1 = vector.multi_reduction <add>, %0, %cst [2] : vector<2x4x256xf32> to vector<2x4xf32>
    %2 = vector.shape_cast %1 : vector<2x4xf32> to vector<2x4x1xf32>
    %cst_2 = arith.constant dense<0.000000e+00> : vector<4x1xf32>
    %3 = vector.multi_reduction <add>, %2, %cst_2 [0] : vector<2x4x1xf32> to vector<4x1xf32>
    %4 = vector.shape_cast %3 : vector<4x1xf32> to vector<1x4x1xf32>
    %cst_3 = arith.constant 0.001953125 : f32
    %5 = vector.broadcast %cst_3 : f32 to vector<1x4x1xf32>
    %6 = arith.mulf %4, %5 : vector<1x4x1xf32>
    %7 = vector.broadcast %6 : vector<1x4x1xf32> to vector<2x4x256xf32>
    %8 = arith.subf %0, %7 : vector<2x4x256xf32>
    %9 = arith.mulf %8, %8 : vector<2x4x256xf32>
    %cst_4 = arith.constant dense<0.000000e+00> : vector<2x4xf32>
    %10 = vector.multi_reduction <add>, %9, %cst_4 [2] : vector<2x4x256xf32> to vector<2x4xf32>
    %11 = vector.shape_cast %10 : vector<2x4xf32> to vector<2x4x1xf32>
    %cst_5 = arith.constant dense<0.000000e+00> : vector<4x1xf32>
    %12 = vector.multi_reduction <add>, %11, %cst_5 [0] : vector<2x4x1xf32> to vector<4x1xf32>
    %13 = vector.shape_cast %12 : vector<4x1xf32> to vector<1x4x1xf32>
    %cst_6 = arith.constant 0.001953125 : f32
    %14 = vector.broadcast %cst_6 : f32 to vector<1x4x1xf32>
    %15 = arith.mulf %13, %14 : vector<1x4x1xf32>
    %cst_7 = arith.constant 9.99999974E-6 : f32
    %16 = vector.broadcast %cst_7 : f32 to vector<1x4x1xf32>
    %17 = arith.addf %15, %16 : vector<1x4x1xf32>
    %18 = math.rsqrt %17 : vector<1x4x1xf32>
    %c0_8 = arith.constant 0 : index
    %c0_9 = arith.constant 0 : index
    %19 = vector.load %arg2[%c0_8, %c0_9] : memref<4x1xf32, #tpu.memory_space<vmem>>, vector<4x1xf32>
    %20 = vector.shape_cast %19 : vector<4x1xf32> to vector<1x4x1xf32>
    %21 = arith.mulf %18, %20 : vector<1x4x1xf32>
    %22 = vector.broadcast %21 : vector<1x4x1xf32> to vector<2x4x256xf32>
    %23 = arith.mulf %8, %22 : vector<2x4x256xf32>
    %c0_10 = arith.constant 0 : index
    %c0_11 = arith.constant 0 : index
    %24 = vector.load %arg3[%c0_10, %c0_11] : memref<4x1xf32, #tpu.memory_space<vmem>>, vector<4x1xf32>
    %25 = vector.shape_cast %24 : vector<4x1xf32> to vector<1x4x1xf32>
    %26 = vector.broadcast %25 : vector<1x4x1xf32> to vector<2x4x256xf32>
    %27 = arith.addf %23, %26 : vector<2x4x256xf32>
    %c0_12 = arith.constant 0 : index
    %c0_13 = arith.constant 0 : index
    %c0_14 = arith.constant 0 : index
    %28 = vector.load %arg4[%c0_12, %c0_13, %c0_14] : memref<2x4x256xf32, #tpu.memory_space<vmem>>, vector<2x4x256xf32>
    tpu.vector_store %arg4[%c0_12, %c0_13, %c0_14], %27 {strides = array<i32>} : memref<2x4x256xf32, #tpu.memory_space<vmem>>, vector<2x4x256xf32>,
    return
  }
  func.func @transform_0(%arg0: i32) -> (i32, i32, i32) {
    %c0_i32 = arith.constant 0 : i32
    %c0_i32_0 = arith.constant 0 : i32
    %c0_i32_1 = arith.constant 0 : i32
    return %c0_i32, %arg0, %c0_i32_0 : i32, i32, i32
  }
  func.func @transform_1(%arg0: i32) -> (i32, i32) {
    %c0_i32 = arith.constant 0 : i32
    %c0_i32_0 = arith.constant 0 : i32
    return %arg0, %c0_i32 : i32, i32
  }
  func.func @transform_2(%arg0: i32) -> (i32, i32) {
    %c0_i32 = arith.constant 0 : i32
    %c0_i32_0 = arith.constant 0 : i32
    return %arg0, %c0_i32 : i32, i32
  }
  func.func @transform_3(%arg0: i32) -> (i32, i32, i32) {
    %c0_i32 = arith.constant 0 : i32
    %c0_i32_0 = arith.constant 0 : i32
    %c0_i32_1 = arith.constant 0 : i32
    return %c0_i32, %arg0, %c0_i32_0 : i32, i32, i32
  }
}

</mosaic_0001>

<llo_original>
// kernel: tpu_custom_call.1
$region0: #{tpu_custom_call.1}
  #allocation0 [shape = 'u32[]', space=smem, size = 0x4, offset = 0x4, fixed_abs, tag = 'smem constant byte address 0x4 - core index']
  #allocation1 [shape = 'u32[144,128]{1,0:T(1,128)}', space=vmem, size = 0x12000, scoped, tag = 'internal scratch']
  %s0 = inlined_call_operand.hbm [shape: f32[2,4,256], index: 0, kind: input, shape index: {}]
  %s1 = inlined_call_operand.vmem [shape: f32[4,1], index: 1, kind: input, shape index: {}]
  %s2 = inlined_call_operand.vmem [shape: f32[4,1], index: 2, kind: input, shape index: {}]
  %s3 = inlined_call_operand.hbm [shape: f32[2,4,256], index: 3, kind: output, shape index: {}]
  %s4 = sld [smem:[#allocation0]]
  $region26: #{tpu_custom_call.1} parent=0
    _
  %s6 = ssub.s32 1, %s4
  %s7 = scalar_select 0, %s6, %s4
  $region1: #{tpu_custom_call.1} parent=0
    #allocation2 [shape = 'u8[8192]{0}', space=vmem, size = 0x2000, scoped, tag = 'input window, operand 0, single buffered']
    #allocation3 [shape = 's32[1]{0}', space=sflag, size = 0x4, scoped, tag = 'scoped memory for tpu_custom_call.1']
    #allocation4 [shape = 's32[1]{0}', space=sflag, size = 0x4, scoped, tag = 'scoped memory for tpu_custom_call.1']
    #allocation5 [shape = 'u8[8192]{0}', space=vmem, size = 0x2000, scoped, tag = 'output window, operand 0, single buffered']
    %8 = vsyncpa [#allocation3], 0
    %9 = vsyncpa [#allocation4], 0
    // Predicated region
    $region2: #{tpu_custom_call.1} parent=1 // pred_check
      _
    $region3: #{tpu_custom_call.1} parent=1 // pred_check_branch
      %11 = sbr.rel (0) target = $region5
    $region4: #{tpu_custom_call.1} parent=1 // pred_region
      %s13 = ssub.s32 256, 256
      %14 = vsyncadd [#allocation3], %s13
      %s15 = sshll.u32 [#allocation2], 4
      %s16 = int_to_ptr.vmem [resolvable:$true] %s15
      %21 = dma.hbm_to_vmem [thread:$0]  %s0, 256, %s16, [#allocation3], 128, 128, 8
    $region5: #{tpu_custom_call.1} parent=1 // pred_fallthru
      _
    // Predicated region
    $region6: #{tpu_custom_call.1} parent=1 // pred_check
      _
    $region7: #{tpu_custom_call.1} parent=1 // pred_check_branch
      %23 = sbr.rel (0) target = $region9
    $region8: #{tpu_custom_call.1} parent=1 // pred_region
      _
    $region9: #{tpu_custom_call.1} parent=1 // pred_fallthru
      _
    // Predicated region
    $region10: #{tpu_custom_call.1} parent=1 // pred_check
      _
    $region11: #{tpu_custom_call.1} parent=1 // pred_check_branch
      %25 = sbr.rel (0) target = $region13
    $region12: #{tpu_custom_call.1} parent=1 // pred_region
      _
    $region13: #{tpu_custom_call.1} parent=1 // pred_fallthru
      _
    // Predicated region
    $region14: #{tpu_custom_call.1} parent=1 // pred_check
      _
    $region15: #{tpu_custom_call.1} parent=1 // pred_check_branch
      %27 = sbr.rel (0) target = $region17
    $region16: #{tpu_custom_call.1} parent=1 // pred_region
      %28 = dma.done [#allocation3], 256
    $region17: #{tpu_custom_call.1} parent=1 // pred_fallthru
      _
    %v29 = vld [vmem:[#allocation2] sm:$0xff]
    %v30 = vld [vmem:[#allocation2 + $0x8] sm:$0xff]
    %v33 = vcombine.high %v29, %v29
    %v34 = vcombine.high %v30, %v30
    %vm37 = vcmask 1043456
    %v38 = vsel %vm37, %v29, 0.0
    %v39 = vsel %vm37, %v33, 0.0
    %v40 = vadd.f32 %v38, %v39
    %41 = vadd.xlane.f32.xlu0 %v40
    %v42 = vpop.xlane.xlu0 %41
    %v43 = vsel %vm37, %v30, 0.0
    %v44 = vsel %vm37, %v34, 0.0
    %v45 = vadd.f32 %v43, %v44
    %46 = vadd.xlane.f32.xlu0 %v45
    %v47 = vpop.xlane.xlu0 %46
    %v48 = vsel %vm37, %v42, 0.0
    %v49 = vsel %vm37, %v47, 0.0
    %v50 = vadd.f32 %v48, %v49
    %v51 = vmul.f32 %v50, 0.001953125
    %v54 = vunpack.c.l.s4 839922192
    %v55 = vunpack.c.0.s8 %v54
    %v56 = vlaneseq
    %v57 = vshrl.u32 %v56, 7
    %v58 = vsub.s32 %v55, %v57
    %v59 = vrot.slane %v51, %v58
    %v61 = vsub.f32 %v29, %v59
    %v62 = vsub.f32 %v30, %v59
    %v63 = vmul.f32 %v61, %v61
    %v64 = vmul.f32 %v62, %v62
    %v67 = vcombine.high %v63, %v63
    %v68 = vcombine.high %v64, %v64
    %v71 = vsel %vm37, %v63, 0.0
    %v72 = vsel %vm37, %v67, 0.0
    %v73 = vadd.f32 %v71, %v72
    %74 = vadd.xlane.f32.xlu0 %v73
    %v75 = vpop.xlane.xlu0 %74
    %v76 = vsel %vm37, %v64, 0.0
    %v77 = vsel %vm37, %v68, 0.0
    %v78 = vadd.f32 %v76, %v77
    %79 = vadd.xlane.f32.xlu0 %v78
    %v80 = vpop.xlane.xlu0 %79
    %v81 = vsel %vm37, %v75, 0.0
    %v82 = vsel %vm37, %v80, 0.0
    %v83 = vadd.f32 %v81, %v82
    %v84 = vmul.f32 %v83, 0.001953125
    %v85 = vadd.f32 %v84, 1e-05
    %v86 = vrsqrt.pop %v85
    %v87 = vld [vmem:[%s1] sm:$0xf]
    %v88 = vmul.f32 %v86, %v87
    %90 = vset.pattern.permute.xlu0 0
    %91 = vperm.xlu0 %90, %v88
    %v92 = vpop.permute.xlu0 %91
    %v94 = vunpack.c.l.s4 839922192
    %v95 = vunpack.c.0.s8 %v94
    %v96 = vlaneseq
    %v97 = vshrl.u32 %v96, 7
    %v98 = vsub.s32 %v95, %v97
    %v99 = vrot.slane %v92, %v98
    %v101 = vmul.f32 %v61, %v99
    %v102 = vmul.f32 %v62, %v99
    %v103 = vld [vmem:[%s2] sm:$0xf]
    %105 = vset.pattern.permute.xlu0 0
    %106 = vperm.xlu0 %105, %v103
    %v107 = vpop.permute.xlu0 %106
    %v109 = vunpack.c.l.s4 839922192
    %v110 = vunpack.c.0.s8 %v109
    %v111 = vlaneseq
    %v112 = vshrl.u32 %v111, 7
    %v113 = vsub.s32 %v110, %v112
    %v114 = vrot.slane %v107, %v113
    %v116 = vadd.f32 %v101, %v114
    %v117 = vadd.f32 %v102, %v114
    %118 = vst [vmem:[#allocation5] sm:$0xff] %v116
    %119 = vst [vmem:[#allocation5 + $0x8] sm:$0xff] %v117
    // Predicated region
    $region18: #{tpu_custom_call.1} parent=1 // pred_check
      _
    $region19: #{tpu_custom_call.1} parent=1 // pred_check_branch
      %121 = sbr.rel (0) target = $region21
    $region20: #{tpu_custom_call.1} parent=1 // pred_region
      %s123 = ssub.s32 256, 256
      %124 = vsyncadd [#allocation4], %s123
      %s125 = sshll.u32 [#allocation5], 4
      %s126 = int_to_ptr.vmem [resolvable:$true] %s125
      %131 = dma.vmem_to_hbm [thread:$0]  %s126, 256, %s3, [#allocation4], 128, 128, 8
    $region21: #{tpu_custom_call.1} parent=1 // pred_fallthru
      _
    // Predicated region
    $region22: #{tpu_custom_call.1} parent=1 // pred_check
      _
    $region23: #{tpu_custom_call.1} parent=1 // pred_check_branch
      %133 = sbr.rel (0) target = $region25
    $region24: #{tpu_custom_call.1} parent=1 // pred_region
      %134 = dma.done [#allocation4], 256
    $region25: #{tpu_custom_call.1} parent=1 // pred_fallthru
      _
    %135 = vsyncpa [#allocation3], 1
    %136 = vsyncpa [#allocation4], 1

</llo_original>
